<compile_context>
chip_gen: v7x
topology: tpu7x:2x2x1
jax: 0.10.0
libtpu: 0.0.40
codegen_flags: <defaults>
</compile_context>

<pallas_src>
import jax
import jax.numpy as jnp
import numpy as np
from jax.experimental import pallas as pl
from jax.experimental.pallas import tpu as pltpu

_EPS = 1e-12  # the module's frozen eps parameter (requires_grad=False)


def _netvlad_kernel(x_ref, wt_ref, bias_ref, cent_ref, out_ref):
    # x_ref: (TB, L, C)  wt_ref: (C, D)  bias_ref: (1, D)  cent_ref: (D, C)  out_ref: (TB, C)
    x = x_ref[...]                                            # (TB, L, C)
    tb, l, c = x.shape
    d = cent_ref.shape[0]

    # scale = mean_L(x^2); direction = x / max(scale, eps)
    # -> one exact reciprocal on the (TB, C) row + broadcast multiplies (EUP + VALU).
    scale = jnp.mean(x * x, axis=1)                           # (TB, C)
    inv_scale = pl.reciprocal(jnp.maximum(scale, jnp.float32(_EPS)))   # (TB, C)
    direction = x * inv_scale[:, None, :]                     # (TB, L, C)

    # Conv1d(kernel_size=1) with a weight shared across the batch:
    # one (TB*L, C) @ (C, D) MXU matmul (f32 accumulation).
    logits = jnp.dot(direction.reshape(tb * l, c), wt_ref[...],
                     preferred_element_type=jnp.float32) + bias_ref[...]   # (TB*L, D)
    logits = logits.reshape(tb, l, d)                         # (TB, L, D)

    # softmax over L (PyTorch: F.softmax(soft_assign, dim=1)), batched over TB.
    m = jnp.max(logits, axis=1, keepdims=True)                # (TB, 1, D)
    e = jnp.exp(logits - m)                                   # (TB, L, D)
    sa = e * pl.reciprocal(jnp.sum(e, axis=1, keepdims=True)) # (TB, L, D)

    # Collapsed VLAD:
    #   out = scale * mean_D(vlad)
    #       = scale/D * ( sum_l (sum_d sa[l,d]) * direction[l,:] - (sum_l sa) @ cent )
    s_l = jnp.sum(sa, axis=2, keepdims=True)                  # (TB, L, 1)  lane reduce (XLU)
    g = jnp.sum(sa, axis=1)                                   # (TB, D)     sublane reduce (XLU)
    term_a = jnp.sum(direction * s_l, axis=1)                 # (TB, C)
    term_b = jnp.dot(g, cent_ref[...],
                     preferred_element_type=jnp.float32)      # (TB, D) @ (D, C) -> (TB, C)
    out_ref[...] = (scale * (1.0 / d)) * (term_a - term_b)    # (TB, C)


def _choose_blocks(bg, l, c, *, max_rows_per_step=512, vmem_budget_bytes=6 * 1024 * 1024):
    """Pick (n_blocks, rows_per_step).

    rows_per_step is capped both by a flat limit and by a VMEM budget for the
    double-buffered f32 input tile + output tile (budget chosen to fit the
    smallest default scoped VMEM across v5e/v6e/v7x with headroom).
    Keeps >= 2 grid steps when possible so both v7x TensorCores get work.
    """
    bytes_per_row = (2 * l * c + 2 * c) * 4
    tb_cap = max(1, min(max_rows_per_step, vmem_budget_bytes // max(bytes_per_row, 1)))
    n_blocks = max(2 if bg >= 2 else 1, pl.cdiv(bg, tb_cap))
    tb = pl.cdiv(bg, n_blocks)
    n_blocks = pl.cdiv(bg, tb)
    return n_blocks, tb


def _forward_3d(x3, wt, bias, cent):
    """x3: (BG, L, C) float32.  wt: (C, D), bias: (1, D), cent: (D, C).  Returns (BG, C)."""
    bg, l, c = x3.shape
    d = cent.shape[0]
    n_blocks, tb = _choose_blocks(bg, l, c)
    bg_pad = n_blocks * tb
    if bg_pad != bg:
        # Zero rows are harmless: scale=0 -> direction=0 -> out=0; sliced off below.
        x3 = jnp.concatenate([x3, jnp.zeros((bg_pad - bg, l, c), x3.dtype)], axis=0)
    xb = x3.reshape(n_blocks, tb, l, c)

    out = pl.pallas_call(
        _netvlad_kernel,
        out_shape=jax.ShapeDtypeStruct((n_blocks, tb, c), jnp.float32),
        grid_spec=pltpu.PrefetchScalarGridSpec(
            num_scalar_prefetch=0,
            grid=(n_blocks,),
            in_specs=[
                # leading grid dim squeezed out -> kernel sees (TB, L, C)
                pl.BlockSpec((None, tb, l, c), lambda i: (i, 0, 0, 0)),
                # replicated (constant index_map) operands; tiny at these sizes
                pl.BlockSpec((c, d), lambda i: (0, 0)),
                pl.BlockSpec((1, d), lambda i: (0, 0)),
                pl.BlockSpec((d, c), lambda i: (0, 0)),
            ],
            out_specs=pl.BlockSpec((None, tb, c), lambda i: (i, 0, 0)),
        ),
        compiler_params=pltpu.CompilerParams(
            dimension_semantics=("parallel",)),
    )(xb, wt, bias, cent)

    return out.reshape(bg_pad, c)[:bg]                        # (BG, C)


def netvlad_like_forward(x, centroids, concentration):
    """Equivalent of NetVLADLike.forward.  centroids: (dim, num_clusters)."""
    centroids = centroids.astype(jnp.float32)
    # _init_params: conv.weight = (2*conc*centroids)[:, :, None],
    #               conv.bias   = -conc * ||centroids||_row
    wt = (2.0 * concentration * centroids).T                  # (C, D): logits = dir @ wt
    bias = (-concentration
            * jnp.sqrt(jnp.sum(centroids * centroids, axis=1)))[None, :]   # (1, D)

    x = x.astype(jnp.float32)
    if x.ndim == 4:
        B, G, L, C = x.shape
        y = _forward_3d(x.reshape(B * G, L, C), wt, bias, centroids)
        return y.reshape(B, G, C)
    elif x.ndim == 3:
        return _forward_3d(x, wt, bias, centroids)
    else:
        raise ValueError("x must be 3D or 4D")


# -------- pure-JAX reference mirroring the PyTorch module (for verification) --------
def _reference_forward(x, centroids, concentration):
    eps = jnp.float32(_EPS)

    def fwd3(x3):
        W = 2.0 * concentration * centroids                   # (D, C)
        b = -concentration * jnp.linalg.norm(centroids, axis=1)
        scale = jnp.mean(x3 ** 2, axis=1, keepdims=True)      # (B, 1, C)
        direction = x3 / jnp.maximum(scale, eps)              # (B, L, C)
        sa = jnp.einsum('blc,dc->bld', direction, W) + b      # (B, L, D)
        sa = jax.nn.softmax(sa, axis=1)
        resid = direction[:, :, None, :] - centroids[None, None, :, :]   # (B, L, D, C)
        resid = resid * sa[..., None]
        vlad = resid.sum(axis=1)                              # (B, D, C)
        return (scale * vlad).mean(axis=1)                    # (B, C)

    if x.ndim == 4:
        B, G, L, C = x.shape
        return fwd3(x.reshape(B * G, L, C)).reshape(B, G, C)
    return fwd3(x)


if __name__ == "__main__":
    # Module hyper-params (input feature dim must equal num_clusters for the
    # module's overwritten conv weight to type-check).
    dim = 8              # D
    num_clusters = 16    # C
    concentration = 0.5
    B, G, L = 2, 3, 8

    key = jax.random.PRNGKey(0)
    k_x, k_c = jax.random.split(key)
    x = jax.random.normal(k_x, (B, G, L, num_clusters), dtype=jnp.float32)
    centroids = jax.random.uniform(k_c, (dim, num_clusters), dtype=jnp.float32)  # torch.rand

    out = jax.block_until_ready(netvlad_like_forward(x, centroids, concentration))
    ref = _reference_forward(x, centroids, concentration)
    np.testing.assert_allclose(np.asarray(out), np.asarray(ref), rtol=1e-4, atol=1e-5)
    assert out.shape == (B, G, num_clusters)

    # Also exercise the 3-D input path (with batch padding: 5 rows -> 2 blocks of 3).
    x3 = jax.random.normal(jax.random.PRNGKey(1), (5, L, num_clusters), dtype=jnp.float32)
    out3 = jax.block_until_ready(netvlad_like_forward(x3, centroids, concentration))
    ref3 = _reference_forward(x3, centroids, concentration)
    np.testing.assert_allclose(np.asarray(out3), np.asarray(ref3), rtol=1e-4, atol=1e-5)
    assert out3.shape == (5, num_clusters)

    print("KERNEL_OK")
</pallas_src>

<mosaic_0001>
module attributes {stable_mosaic.version = 11 : i64} {
  func.func @_netvlad_kernel(%arg0: i32, %arg1: memref<1x3x8x16xf32, #tpu.memory_space<vmem>>, %arg2: memref<16x8xf32, #tpu.memory_space<vmem>>, %arg3: memref<1x8xf32, #tpu.memory_space<vmem>>, %arg4: memref<8x16xf32, #tpu.memory_space<vmem>>, %arg5: memref<1x3x16xf32, #tpu.memory_space<vmem>>) attributes {dimension_semantics = [#tpu.dimension_semantics<parallel>], iteration_bounds = array<i64: 2>, scalar_prefetch = 0 : i64, scratch_operands = 0 : i64, tpu.core_type = #tpu.core_type<tc>, window_params = [{transform_indices = @transform_0, window_bounds = array<i64: 1, 3, 8, 16>}, {pipeline_mode = #tpu.pipeline_mode<synchronous>, transform_indices = @transform_1, window_bounds = array<i64: 16, 8>}, {pipeline_mode = #tpu.pipeline_mode<synchronous>, transform_indices = @transform_2, window_bounds = array<i64: 1, 8>}, {pipeline_mode = #tpu.pipeline_mode<synchronous>, transform_indices = @transform_3, window_bounds = array<i64: 8, 16>}, {transform_indices = @transform_4, window_bounds = array<i64: 1, 3, 16>}]} {
    %c0 = arith.constant 0 : index
    %c0_0 = arith.constant 0 : index
    %c0_1 = arith.constant 0 : index
    %c0_2 = arith.constant 0 : index
    %0 = vector.load %arg1[%c0, %c0_0, %c0_1, %c0_2] : memref<1x3x8x16xf32, #tpu.memory_space<vmem>>, vector<1x3x8x16xf32>
    %1 = vector.shape_cast %0 : vector<1x3x8x16xf32> to vector<3x8x16xf32>
    %2 = arith.mulf %1, %1 : vector<3x8x16xf32>
    %cst = arith.constant dense<0.000000e+00> : vector<3x16xf32>
    %3 = vector.multi_reduction <add>, %2, %cst [1] : vector<3x8x16xf32> to vector<3x16xf32>
    %cst_3 = arith.constant 8.000000e+00 : f32
    %4 = vector.broadcast %cst_3 : f32 to vector<3x16xf32>
    %5 = arith.divf %3, %4 : vector<3x16xf32>
    %cst_4 = arith.constant 9.99999996E-13 : f32
    %6 = vector.broadcast %cst_4 : f32 to vector<3x16xf32>
    %7 = arith.maximumf %5, %6 : vector<3x16xf32>
    %8 = tpu.reciprocal %7 : vector<3x16xf32> -> vector<3x16xf32>
    %9 = vector.shape_cast %8 : vector<3x16xf32> to vector<3x1x16xf32>
    %10 = vector.broadcast %9 : vector<3x1x16xf32> to vector<3x8x16xf32>
    %11 = arith.mulf %1, %10 : vector<3x8x16xf32>
    %12 = vector.shape_cast %11 : vector<3x8x16xf32> to vector<24x16xf32>
    %c0_5 = arith.constant 0 : index
    %c0_6 = arith.constant 0 : index
    %13 = vector.load %arg2[%c0_5, %c0_6] : memref<16x8xf32, #tpu.memory_space<vmem>>, vector<16x8xf32>
    %cst_7 = arith.constant dense<0.000000e+00> : vector<24x8xf32>
    %14 = tpu.matmul %12, %13, %cst_7 {dimension_numbers = #tpu.dot_dimension_numbers<[1], [0], [0], [1], [0, 0, 1, 1], [], []>} : vector<24x16xf32>, vector<16x8xf32>, vector<24x8xf32> -> vector<24x8xf32>
    %c0_8 = arith.constant 0 : index
    %c0_9 = arith.constant 0 : index
    %15 = vector.load %arg3[%c0_8, %c0_9] : memref<1x8xf32, #tpu.memory_space<vmem>>, vector<1x8xf32>
    %16 = vector.broadcast %15 : vector<1x8xf32> to vector<24x8xf32>
    %17 = arith.addf %14, %16 : vector<24x8xf32>
    %18 = vector.shape_cast %17 : vector<24x8xf32> to vector<3x8x8xf32>
    %cst_10 = arith.constant dense<0xFF800000> : vector<3x8xf32>
    %19 = vector.multi_reduction <maximumf>, %18, %cst_10 [1] : vector<3x8x8xf32> to vector<3x8xf32>
    %20 = vector.shape_cast %19 : vector<3x8xf32> to vector<3x1x8xf32>
    %21 = vector.broadcast %20 : vector<3x1x8xf32> to vector<3x8x8xf32>
    %22 = arith.subf %18, %21 : vector<3x8x8xf32>
    %23 = math.exp %22 : vector<3x8x8xf32>
    %cst_11 = arith.constant dense<0.000000e+00> : vector<3x8xf32>
    %24 = vector.multi_reduction <add>, %23, %cst_11 [1] : vector<3x8x8xf32> to vector<3x8xf32>
    %25 = vector.shape_cast %24 : vector<3x8xf32> to vector<3x1x8xf32>
    %26 = tpu.reciprocal %25 : vector<3x1x8xf32> -> vector<3x1x8xf32>
    %27 = vector.broadcast %26 : vector<3x1x8xf32> to vector<3x8x8xf32>
    %28 = arith.mulf %23, %27 : vector<3x8x8xf32>
    %cst_12 = arith.constant dense<0.000000e+00> : vector<3x8xf32>
    %29 = vector.multi_reduction <add>, %28, %cst_12 [2] : vector<3x8x8xf32> to vector<3x8xf32>
    %30 = vector.shape_cast %29 : vector<3x8xf32> to vector<3x8x1xf32>
    %cst_13 = arith.constant dense<0.000000e+00> : vector<3x8xf32>
    %31 = vector.multi_reduction <add>, %28, %cst_13 [1] : vector<3x8x8xf32> to vector<3x8xf32>
    %32 = vector.broadcast %30 : vector<3x8x1xf32> to vector<3x8x16xf32>
    %33 = arith.mulf %11, %32 : vector<3x8x16xf32>
    %cst_14 = arith.constant dense<0.000000e+00> : vector<3x16xf32>
    %34 = vector.multi_reduction <add>, %33, %cst_14 [1] : vector<3x8x16xf32> to vector<3x16xf32>
    %c0_15 = arith.constant 0 : index
    %c0_16 = arith.constant 0 : index
    %35 = vector.load %arg4[%c0_15, %c0_16] : memref<8x16xf32, #tpu.memory_space<vmem>>, vector<8x16xf32>
    %cst_17 = arith.constant dense<0.000000e+00> : vector<3x16xf32>
    %36 = tpu.matmul %31, %35, %cst_17 {dimension_numbers = #tpu.dot_dimension_numbers<[1], [0], [0], [1], [0, 0, 1, 1], [], []>} : vector<3x8xf32>, vector<8x16xf32>, vector<3x16xf32> -> vector<3x16xf32>
    %cst_18 = arith.constant 1.250000e-01 : f32
    %37 = vector.broadcast %cst_18 : f32 to vector<3x16xf32>
    %38 = arith.mulf %5, %37 : vector<3x16xf32>
    %39 = arith.subf %34, %36 : vector<3x16xf32>
    %40 = arith.mulf %38, %39 : vector<3x16xf32>
    %c0_19 = arith.constant 0 : index
    %c0_20 = arith.constant 0 : index
    %c0_21 = arith.constant 0 : index
    %41 = vector.load %arg5[%c0_19, %c0_20, %c0_21] : memref<1x3x16xf32, #tpu.memory_space<vmem>>, vector<1x3x16xf32>
    %42 = vector.shape_cast %41 : vector<1x3x16xf32> to vector<3x16xf32>
    %43 = vector.shape_cast %40 : vector<3x16xf32> to vector<1x3x16xf32>
    tpu.vector_store %arg5[%c0_19, %c0_20, %c0_21], %43 {strides = array<i32>} : memref<1x3x16xf32, #tpu.memory_space<vmem>>, vector<1x3x16xf32>,
    return
  }
  func.func @transform_0(%arg0: i32) -> (i32, i32, i32, i32) {
    %c0_i32 = arith.constant 0 : i32
    %c0_i32_0 = arith.constant 0 : i32
    %c0_i32_1 = arith.constant 0 : i32
    %c0_i32_2 = arith.constant 0 : i32
    return %arg0, %c0_i32, %c0_i32_0, %c0_i32_1 : i32, i32, i32, i32
  }
  func.func @transform_1(%arg0: i32) -> (i32, i32) {
    %c0_i32 = arith.constant 0 : i32
    %c0_i32_0 = arith.constant 0 : i32
    %c0_i32_1 = arith.constant 0 : i32
    return %c0_i32, %c0_i32_0 : i32, i32
  }
  func.func @transform_2(%arg0: i32) -> (i32, i32) {
    %c0_i32 = arith.constant 0 : i32
    %c0_i32_0 = arith.constant 0 : i32
    %c0_i32_1 = arith.constant 0 : i32
    return %c0_i32, %c0_i32_0 : i32, i32
  }
  func.func @transform_3(%arg0: i32) -> (i32, i32) {
    %c0_i32 = arith.constant 0 : i32
    %c0_i32_0 = arith.constant 0 : i32
    %c0_i32_1 = arith.constant 0 : i32
    return %c0_i32, %c0_i32_0 : i32, i32
  }
  func.func @transform_4(%arg0: i32) -> (i32, i32, i32) {
    %c0_i32 = arith.constant 0 : i32
    %c0_i32_0 = arith.constant 0 : i32
    %c0_i32_1 = arith.constant 0 : i32
    return %arg0, %c0_i32, %c0_i32_0 : i32, i32, i32
  }
}

</mosaic_0001>

<llo_original>
// kernel: tpu_custom_call.1
$region0: #{tpu_custom_call.1}
  #allocation0 [shape = 'u32[]', space=smem, size = 0x4, offset = 0x4, fixed_abs, tag = 'smem constant byte address 0x4 - core index']
  #allocation1 [shape = 'u32[144,128]{1,0:T(1,128)}', space=vmem, size = 0x12000, scoped, tag = 'internal scratch']
  %s0 = inlined_call_operand.hbm [shape: f32[2,3,8,16], index: 0, kind: input, shape index: {}]
  %s1 = inlined_call_operand.vmem [shape: f32[16,8], index: 1, kind: input, shape index: {}]
  %s2 = inlined_call_operand.vmem [shape: f32[1,8], index: 2, kind: input, shape index: {}]
  %s3 = inlined_call_operand.vmem [shape: f32[8,16], index: 3, kind: input, shape index: {}]
  %s4 = inlined_call_operand.vmem [shape: f32[2,3,16], index: 4, kind: output, shape index: {}]
  %s5 = sld [smem:[#allocation0]]
  $region53: #{tpu_custom_call.1} parent=0
    _
  %s7 = ssub.s32 1, %s5
  %s8 = scalar_select 0, %s7, %s5
  $region1: #{tpu_custom_call.1} parent=0
    #allocation2 [shape = 'u8[24576]{0}', space=vmem, size = 0x6000, scoped, tag = 'input window, operand 0']
    #allocation3 [shape = 's32[2]{0}', space=sflag, size = 0x8, scoped, tag = 'scoped memory for tpu_custom_call.1']
    %9 = vsyncpa [#allocation3], 0
    %s10 = scalar_lea.sflag [#allocation3], 1
    %11 = vsyncpa %s10, 0
    loop: start=0, step=1, limit=4
    $region2: #{tpu_custom_call.1} parent=1 // loop_pre_header
      _
    $region3: #{tpu_custom_call.1} parent=1 // loop_header
      %s13 = sphi 0, %s17
      %p14 = scmp.ge.s32.totalorder %s13, 4
      %s23 = sphi 0, %s25
      %s26 = sphi 0, %s23
      %s27 = sphi 0, %s26
      %s43 = sphi 0, %s27
      %s47 = sphi 0, %s47
      %s49 = sphi 0, %s47
      %s50 = sphi 0, %s49
      %s64 = sphi 0, %s50
      %s68 = sphi 0, %s68
      %s70 = sphi 0, %s68
      %s71 = sphi 0, %s70
      %s85 = sphi 0, %s71
      %s89 = sphi 0, %s89
      %s91 = sphi 0, %s89
      %s92 = sphi 0, %s91
      %s106 = sphi 0, %s92
      %s112 = sphi 0, %s114
      %s115 = sphi 0, %s112
      %s116 = sphi 0, %s115
      %s132 = sphi 0, %s116
    $region4: #{tpu_custom_call.1} parent=1 // loop_header_branch
      %16 = sbr.rel (%p14) target = $region8
    $region5: #{tpu_custom_call.1} parent=1 // loop_body
      %s18 = ssub.s32 %s13, 1
      %s19 = ssub.s32 %s13, 2
      %s20 = sadd.s32 %s13, 1
      %s21 = ssub.s32 %s13, %s20
      %p22 = scmp.eq.s32.totalorder %s21, 0
      %s24 = sadd.s32 %s23, 1
      %s25 = scalar_select %p22, %s23, %s24
      %p28 = pneg %p22
      %p29 = scmp.eq.s32.totalorder %s13, 1
      %p30 = por %p28, %p29
      %p31 = scmp.ne.s32.totalorder %s23, %s26
      %p32 = scmp.eq.s32.totalorder %s13, 0
      %p33 = por %p31, %p32
      %p34 = scmp.ne.s32.totalorder %s23, %s26
      %p35 = scmp.eq.s32.totalorder %s18, 1
      %p36 = por %p34, %p35
      %p37 = scmp.ne.s32.totalorder %s26, %s27
      %p38 = scmp.eq.s32.totalorder %s18, 0
      %p39 = por %p37, %p38
      %p40 = scmp.ne.s32.totalorder %s26, %s27
      %p41 = scmp.eq.s32.totalorder %s19, 1
      %p42 = por %p40, %p41
      %p44 = scmp.ne.s32.totalorder %s27, %s43
      %p45 = scmp.eq.s32.totalorder %s19, 0
      %p46 = por %p44, %p45
      %s48 = sadd.s32 %s47, 1
      %p51 = scmp.eq.s32.totalorder %s13, 1
      %p52 = scmp.ne.s32.totalorder %s47, %s49
      %p53 = scmp.eq.s32.totalorder %s13, 0
      %p54 = por %p52, %p53
      %p55 = scmp.ne.s32.totalorder %s47, %s49
      %p56 = scmp.eq.s32.totalorder %s18, 1
      %p57 = por %p55, %p56
      %p58 = scmp.ne.s32.totalorder %s49, %s50
      %p59 = scmp.eq.s32.totalorder %s18, 0
      %p60 = por %p58, %p59
      %p61 = scmp.ne.s32.totalorder %s49, %s50
      %p62 = scmp.eq.s32.totalorder %s19, 1
      %p63 = por %p61, %p62
      %p65 = scmp.ne.s32.totalorder %s50, %s64
      %p66 = scmp.eq.s32.totalorder %s19, 0
      %p67 = por %p65, %p66
      %s69 = sadd.s32 %s68, 1
      %p72 = scmp.eq.s32.totalorder %s13, 1
      %p73 = scmp.ne.s32.totalorder %s68, %s70
      %p74 = scmp.eq.s32.totalorder %s13, 0
      %p75 = por %p73, %p74
      %p76 = scmp.ne.s32.totalorder %s68, %s70
      %p77 = scmp.eq.s32.totalorder %s18, 1
      %p78 = por %p76, %p77
      %p79 = scmp.ne.s32.totalorder %s70, %s71
      %p80 = scmp.eq.s32.totalorder %s18, 0
      %p81 = por %p79, %p80
      %p82 = scmp.ne.s32.totalorder %s70, %s71
      %p83 = scmp.eq.s32.totalorder %s19, 1
      %p84 = por %p82, %p83
      %p86 = scmp.ne.s32.totalorder %s71, %s85
      %p87 = scmp.eq.s32.totalorder %s19, 0
      %p88 = por %p86, %p87
      %s90 = sadd.s32 %s89, 1
      %p93 = scmp.eq.s32.totalorder %s13, 1
      %p94 = scmp.ne.s32.totalorder %s89, %s91
      %p95 = scmp.eq.s32.totalorder %s13, 0
      %p96 = por %p94, %p95
      %p97 = scmp.ne.s32.totalorder %s89, %s91
      %p98 = scmp.eq.s32.totalorder %s18, 1
      %p99 = por %p97, %p98
      %p100 = scmp.ne.s32.totalorder %s91, %s92
      %p101 = scmp.eq.s32.totalorder %s18, 0
      %p102 = por %p100, %p101
      %p103 = scmp.ne.s32.totalorder %s91, %s92
      %p104 = scmp.eq.s32.totalorder %s19, 1
      %p105 = por %p103, %p104
      %p107 = scmp.ne.s32.totalorder %s92, %s106
      %p108 = scmp.eq.s32.totalorder %s19, 0
      %p109 = por %p107, %p108
      %s110 = ssub.s32 %s13, %s20
      %p111 = scmp.eq.s32.totalorder %s110, 0
      %s113 = sadd.s32 %s112, 1
      %s114 = scalar_select %p111, %s112, %s113
      %p117 = pneg %p111
      %p118 = scmp.eq.s32.totalorder %s13, 1
      %p119 = por %p117, %p118
      %p120 = scmp.ne.s32.totalorder %s112, %s115
      %p121 = scmp.eq.s32.totalorder %s13, 0
      %p122 = por %p120, %p121
      %p123 = scmp.ne.s32.totalorder %s112, %s115
      %p124 = scmp.eq.s32.totalorder %s18, 1
      %p125 = por %p123, %p124
      %p126 = scmp.ne.s32.totalorder %s115, %s116
      %p127 = scmp.eq.s32.totalorder %s18, 0
      %p128 = por %p126, %p127
      %p129 = scmp.ne.s32.totalorder %s115, %s116
      %p130 = scmp.eq.s32.totalorder %s19, 1
      %p131 = por %p129, %p130
      %p133 = scmp.ne.s32.totalorder %s116, %s132
      %p134 = scmp.eq.s32.totalorder %s19, 0
      %p135 = por %p133, %p134
      %p136 = scmp.le.s32.totalorder 1, %s13
      %p137 = scmp.lt.s32.totalorder %s13, 3
      %p138 = pnand %p136, %p137
      %p139 = pneg %p138
      // Predicated region
      $region9: #{tpu_custom_call.1} parent=5 // pred_check
        _
      $region10: #{tpu_custom_call.1} parent=5 // pred_check_branch
        %141 = sbr.rel (%p138) target = $region12
      $region11: #{tpu_custom_call.1} parent=5 // pred_region
        %s142 = ssub.s32 %s13, 1
        // Predicated region
        $region13: #{tpu_custom_call.1} parent=11 // pred_check
          %p143 = pneg %p60
        $region14: #{tpu_custom_call.1} parent=11 // pred_check_branch
          %145 = sbr.rel (%p143) target = $region16
        $region15: #{tpu_custom_call.1} parent=11 // pred_region
          _
        $region16: #{tpu_custom_call.1} parent=11 // pred_fallthru
          _
        // Predicated region
        $region17: #{tpu_custom_call.1} parent=11 // pred_check
          %p146 = pneg %p81
        $region18: #{tpu_custom_call.1} parent=11 // pred_check_branch
          %148 = sbr.rel (%p146) target = $region20
        $region19: #{tpu_custom_call.1} parent=11 // pred_region
          _
        $region20: #{tpu_custom_call.1} parent=11 // pred_fallthru
          _
        // Predicated region
        $region21: #{tpu_custom_call.1} parent=11 // pred_check
          %p149 = pneg %p102
        $region22: #{tpu_custom_call.1} parent=11 // pred_check_branch
          %151 = sbr.rel (%p149) target = $region24
        $region23: #{tpu_custom_call.1} parent=11 // pred_region
          _
        $region24: #{tpu_custom_call.1} parent=11 // pred_fallthru
          _
      $region12: #{tpu_custom_call.1} parent=5 // pred_fallthru
        _
      %p152 = scmp.lt.s32.totalorder %s13, 2
      // Predicated region
      $region25: #{tpu_custom_call.1} parent=5 // pred_check
        %p153 = pneg %p152
      $region26: #{tpu_custom_call.1} parent=5 // pred_check_branch
        %155 = sbr.rel (%p153) target = $region28
      $region27: #{tpu_custom_call.1} parent=5 // pred_region
        // Predicated region
        $region29: #{tpu_custom_call.1} parent=27 // pred_check
          %p156 = pneg %p33
        $region30: #{tpu_custom_call.1} parent=27 // pred_check_branch
          %158 = sbr.rel (%p156) target = $region32
        $region31: #{tpu_custom_call.1} parent=27 // pred_region
          %s159 = sand.u32 %s23, 1
          %s160 = scalar_lea.sflag [#allocation3], %s159
          %s161 = sand.u32 %s23, 1
          %s162 = smul.addr %s161, 24
          %s163 = scalar_lea.vmem [#allocation2], %s162
          %s165 = ssub.s32 384, 384
          %166 = vsyncadd %s160, %s165
          %s167 = smul.addr %s13, 3
          %s168 = smul.addr %s167, 128
          %s169 = scalar_lea.hbm %s0, %s168
          %s170 = sshll.u32 %s163, 4
          %s171 = int_to_ptr.vmem [resolvable:$true] %s170
          %176 = dma.hbm_to_vmem [thread:$0]  %s169, 384, %s171, %s160, 128, 128, 8
        $region32: #{tpu_custom_call.1} parent=27 // pred_fallthru
          _
      $region28: #{tpu_custom_call.1} parent=5 // pred_fallthru
        _
      %p177 = scmp.le.s32.totalorder 1, %s13
      %p178 = scmp.lt.s32.totalorder %s13, 3
      %p179 = pnand %p177, %p178
      %p180 = pneg %p179
      // Predicated region
      $region33: #{tpu_custom_call.1} parent=5 // pred_check
        _
      $region34: #{tpu_custom_call.1} parent=5 // pred_check_branch
        %182 = sbr.rel (%p179) target = $region36
      $region35: #{tpu_custom_call.1} parent=5 // pred_region
        %s183 = ssub.s32 %s13, 1
        %s184 = sand.u32 %s26, 1
        %s185 = scalar_lea.sflag [#allocation3], %s184
        %s186 = sand.u32 %s26, 1
        %s187 = smul.addr %s186, 24
        %s188 = scalar_lea.vmem [#allocation2], %s187
        // Predicated region
        $region37: #{tpu_custom_call.1} parent=35 // pred_check
          %p189 = pneg %p39
        $region38: #{tpu_custom_call.1} parent=35 // pred_check_branch
          %191 = sbr.rel (%p189) target = $region40
        $region39: #{tpu_custom_call.1} parent=35 // pred_region
          %192 = dma.done %s185, 384
        $region40: #{tpu_custom_call.1} parent=35 // pred_fallthru
          _
        %s193 = sand.u32 %s26, 1
        %s194 = scalar_lea.sflag [#allocation3], %s193
        %s195 = sand.u32 %s26, 1
        %s196 = smul.addr %s195, 24
        %s197 = scalar_lea.vmem [#allocation2], %s196
        %p198 = pneg %p39
        %p199 = pneg %p36
        %p200 = pneg %p60
        %p201 = pneg %p57
        %p202 = pneg %p81
        %p203 = pneg %p78
        %p204 = pneg %p102
        %p205 = pneg %p99
        %p206 = pneg %p128
        %p207 = pneg %p125
        %p208 = scmp.lt.s32.totalorder %s18, 1
        %s209 = scalar_select %p208, %s18, 1
        %s210 = smul.addr %s209, 4
        %s211 = scalar_lea.vmem %s4, %s210
        %p212 = scmp.lt.s32.totalorder %s18, 1
        %s213 = scalar_select %p212, %s18, 1
        %s214 = smul.addr %s213, 4
        %s215 = scalar_lea.vmem %s4, %s214
        %v216 = vld [vmem:[%s188] sm:$0xff]
        %v217 = vld [vmem:[%s188 + $0x8] sm:$0xff]
        %v218 = vld [vmem:[%s188 + $0x10] sm:$0xff]
        %v219 = vmul.f32 %v216, %v216
        %v220 = vmul.f32 %v217, %v217
        %v221 = vmul.f32 %v218, %v218
        %vm222 = vcmask 130048
        %v223 = vsel %vm222, %v219, 0.0
        %v224 = vrot.slane %v223, 4
        %v225 = vadd.f32 %v223, %v224
        %v226 = vrot.slane %v225, 2
        %v227 = vadd.f32 %v225, %v226
        %v228 = vrot.slane %v227, 1
        %v229 = vadd.f32 %v227, %v228
        %v230 = vsel %vm222, %v220, 0.0
        %v231 = vrot.slane %v230, 4
        %v232 = vadd.f32 %v230, %v231
        %v233 = vrot.slane %v232, 2
        %v234 = vadd.f32 %v232, %v233
        %v235 = vrot.slane %v234, 1
        %v236 = vadd.f32 %v234, %v235
        %v237 = vsel %vm222, %v221, 0.0
        %v238 = vrot.slane %v237, 4
        %v239 = vadd.f32 %v237, %v238
        %v240 = vrot.slane %v239, 2
        %v241 = vadd.f32 %v239, %v240
        %v242 = vrot.slane %v241, 1
        %v243 = vadd.f32 %v241, %v242
        %v244 = vrcp.pop 8.0
        %v245 = vmul.f32 %v229, %v244
        %v246 = vmul.f32 %v236, %v244
        %v247 = vmul.f32 %v243, %v244
        %v248 = vmax.f32 %v245, 1e-12
        %v249 = vmax.f32 %v246, 1e-12
        %v250 = vmax.f32 %v247, 1e-12
        %v251 = vrcp.pop %v248
        %v252 = vrcp.pop %v249
        %v253 = vrcp.pop %v250
        %v254 = vmul.f32 %v216, %v251
        %v255 = vmul.f32 %v217, %v252
        %v256 = vmul.f32 %v218, %v253
        %v257 = vld [vmem:[%s1] sm:$0xff]
        %v258 = vld [vmem:[%s1 + $0x8] sm:$0xff]
        %v259 = vld [vmem:[%s2] sm:$0x1]
        %v261 = vlaneseq
        %v262 = vshrl.u32 %v261, 7
        %v263 = vsub.s32 0, %v262
        %v264 = vrot.slane %v259, %v263
        %v267 = vsel %vm222, %v254, 0
        %v270 = vsel %vm222, %v255, 0
        %v273 = vsel %vm222, %v256, 0
        %275 = vmatprep.subr.mxu0 0.0
        %276 = vmatpush1.msra.mxu0 %v257
        %277 = vmatprep.subr.mxu0 0.0
        %278 = vmatpush1.msra.mxu0 %v258
        %279 = vmatprep.subr.mxu0 0.0
        %280 = vmatpush1.msra.mxu0 0.0
        %281 = vmatprep.subr.mxu0 0.0
        %282 = vmatpush1.msra.mxu0 0.0
        %283 = vmatprep.subr.mxu0 0.0
        %284 = vmatpush1.msra.mxu0 0.0
        %285 = vmatprep.subr.mxu0 0.0
        %286 = vmatpush1.msra.mxu0 0.0
        %287 = vmatprep.subr.mxu0 0.0
        %288 = vmatpush1.msra.mxu0 0.0
        %289 = vmatprep.subr.mxu0 0.0
        %290 = vmatpush1.msra.mxu0 0.0
        %291 = vmatprep.subr.mxu0 0.0
        %292 = vmatpush1.msra.mxu0 0.0
        %293 = vmatprep.subr.mxu0 0.0
        %294 = vmatpush1.msra.mxu0 0.0
        %295 = vmatprep.subr.mxu0 0.0
        %296 = vmatpush1.msra.mxu0 0.0
        %297 = vmatprep.subr.mxu0 0.0
        %298 = vmatpush1.msra.mxu0 0.0
        %299 = vmatprep.subr.mxu0 0.0
        %300 = vmatpush1.msra.mxu0 0.0
        %301 = vmatprep.subr.mxu0 0.0
        %302 = vmatpush1.msra.mxu0 0.0
        %303 = vmatprep.subr.mxu0 0.0
        %304 = vmatpush1.msra.mxu0 0.0
        %305 = vmatprep.subr.mxu0 0.0
        %306 = vmatpush1.msra.mxu0 0.0
        %307 = vmatprep.subr.mxu0 0.0
        %308 = vmatpush1.msra.mxu0 0.0
        %309 = vmatprep.subr.mxu0 0.0
        %310 = vmatpush1.msra.mxu0 0.0
        %311 = vmatprep.subr.mxu0 0.0
        %312 = vmatpush1.msra.mxu0 0.0
        %313 = vmatprep.subr.mxu0 0.0
        %314 = vmatpush1.msra.mxu0 0.0
        %315 = vmatprep.subr.mxu0 0.0
        %316 = vmatpush1.msra.mxu0 0.0
        %317 = vmatprep.subr.mxu0 0.0
        %318 = vmatpush1.msra.mxu0 0.0
        %319 = vmatprep.subr.mxu0 0.0
        %320 = vmatpush1.msra.mxu0 0.0
        %321 = vmatprep.subr.mxu0 0.0
        %322 = vmatpush1.msra.mxu0 0.0
        %323 = vmatprep.subr.mxu0 0.0
        %324 = vmatpush1.msra.mxu0 0.0
        %325 = vmatprep.subr.mxu0 0.0
        %326 = vmatpush1.msra.mxu0 0.0
        %327 = vmatprep.subr.mxu0 0.0
        %328 = vmatpush1.msra.mxu0 0.0
        %329 = vmatprep.subr.mxu0 0.0
        %330 = vmatpush1.msra.mxu0 0.0
        %331 = vmatprep.subr.mxu0 0.0
        %332 = vmatpush1.msra.mxu0 0.0
        %333 = vmatprep.subr.mxu0 0.0
        %334 = vmatpush1.msra.mxu0 0.0
        %335 = vmatprep.subr.mxu0 0.0
        %336 = vmatpush1.msra.mxu0 0.0
        %337 = vmatprep.subr.mxu0 0.0
        %338 = vmatpush1.msra.mxu0 0.0
        %339 = vmatprep.mubr.f32.mxu0 0.0
        %340 = vmatmul.mubr.f32.gmra.mrb[0].mxu0 %v267
        %v341 = vpop.f32.mrb[0].mxu0
        %v342 = vadd.f32 %v264, %v341
        %v343 = vpop.f32.mrb[0].mxu0
        %344 = vmatprep.mubr.f32.mxu0 0.0
        %345 = vmatmul.mubr.f32.gmra.mrb[0].mxu0 %v270
        %v346 = vpop.f32.mrb[0].mxu0
        %v347 = vadd.f32 %v264, %v346
        %v348 = vpop.f32.mrb[0].mxu0
        %349 = vmatprep.mubr.f32.mxu0 0.0
        %350 = vmatmul.mubr.f32.gmra.mrb[0].mxu0 %v273
        %v351 = vpop.f32.mrb[0].mxu0
        %v352 = vadd.f32 %v264, %v351
        %v353 = vpop.f32.mrb[0].mxu0
        %354 = vdwg.mxu0
        %vm355 = vcmask 64512
        %v356 = vsel %vm355, %v342, -inf
        %v357 = vrot.slane %v356, 4
        %v358 = vmax.f32 %v356, %v357
        %v359 = vrot.slane %v358, 2
        %v360 = vmax.f32 %v358, %v359
        %v361 = vrot.slane %v360, 1
        %v362 = vmax.f32 %v360, %v361
        %v363 = vsel %vm355, %v347, -inf
        %v364 = vrot.slane %v363, 4
        %v365 = vmax.f32 %v363, %v364
        %v366 = vrot.slane %v365, 2
        %v367 = vmax.f32 %v365, %v366
        %v368 = vrot.slane %v367, 1
        %v369 = vmax.f32 %v367, %v368
        %v370 = vsel %vm355, %v352, -inf
        %v371 = vrot.slane %v370, 4
        %v372 = vmax.f32 %v370, %v371
        %v373 = vrot.slane %v372, 2
        %v374 = vmax.f32 %v372, %v373
        %v375 = vrot.slane %v374, 1
        %v376 = vmax.f32 %v374, %v375
        %v377 = vsub.f32 %v342, %v362
        %v378 = vsub.f32 %v347, %v369
        %v379 = vsub.f32 %v352, %v376
        %v380 = vmul.f32 %v377, 1.442695
        %v381 = vpow.pop %v380
        %v382 = vmul.f32 %v378, 1.442695
        %v383 = vpow.pop %v382
        %v384 = vmul.f32 %v379, 1.442695
        %v385 = vpow.pop %v384
        %v386 = vsel %vm355, %v381, 0.0
        %v387 = vrot.slane %v386, 4
        %v388 = vadd.f32 %v386, %v387
        %v389 = vrot.slane %v388, 2
        %v390 = vadd.f32 %v388, %v389
        %v391 = vrot.slane %v390, 1
        %v392 = vadd.f32 %v390, %v391
        %v393 = vsel %vm355, %v383, 0.0
        %v394 = vrot.slane %v393, 4
        %v395 = vadd.f32 %v393, %v394
        %v396 = vrot.slane %v395, 2
        %v397 = vadd.f32 %v395, %v396
        %v398 = vrot.slane %v397, 1
        %v399 = vadd.f32 %v397, %v398
        %v400 = vsel %vm355, %v385, 0.0
        %v401 = vrot.slane %v400, 4
        %v402 = vadd.f32 %v400, %v401
        %v403 = vrot.slane %v402, 2
        %v404 = vadd.f32 %v402, %v403
        %v405 = vrot.slane %v404, 1
        %v406 = vadd.f32 %v404, %v405
        %v407 = vrcp.pop %v392
        %v408 = vrcp.pop %v399
        %v409 = vrcp.pop %v406
        %v410 = vmul.f32 %v381, %v407
        %v411 = vmul.f32 %v383, %v408
        %v412 = vmul.f32 %v385, %v409
        %v413 = vsel %vm355, %v410, 0.0
        %414 = vadd.xlane.f32.xlu0 %v413
        %v415 = vpop.xlane.xlu0 %414
        %v416 = vsel %vm355, %v411, 0.0
        %417 = vadd.xlane.f32.xlu0 %v416
        %v418 = vpop.xlane.xlu0 %417
        %v419 = vsel %vm355, %v412, 0.0
        %420 = vadd.xlane.f32.xlu0 %v419
        %v421 = vpop.xlane.xlu0 %420
        %v422 = vrot.slane %v413, 4
        %v423 = vadd.f32 %v413, %v422
        %v424 = vrot.slane %v423, 2
        %v425 = vadd.f32 %v423, %v424
        %v426 = vrot.slane %v425, 1
        %v427 = vadd.f32 %v425, %v426
        %v428 = vrot.slane %v416, 4
        %v429 = vadd.f32 %v416, %v428
        %v430 = vrot.slane %v429, 2
        %v431 = vadd.f32 %v429, %v430
        %v432 = vrot.slane %v431, 1
        %v433 = vadd.f32 %v431, %v432
        %v434 = vrot.slane %v419, 4
        %v435 = vadd.f32 %v419, %v434
        %v436 = vrot.slane %v435, 2
        %v437 = vadd.f32 %v435, %v436
        %v438 = vrot.slane %v437, 1
        %v439 = vadd.f32 %v437, %v438
        %v440 = vmul.f32 %v254, %v415
        %v441 = vmul.f32 %v255, %v418
        %v442 = vmul.f32 %v256, %v421
        %v443 = vsel %vm222, %v440, 0.0
        %v444 = vrot.slane %v443, 4
        %v445 = vadd.f32 %v443, %v444
        %v446 = vrot.slane %v445, 2
        %v447 = vadd.f32 %v445, %v446
        %v448 = vrot.slane %v447, 1
        %v449 = vadd.f32 %v447, %v448
        %v450 = vsel %vm222, %v441, 0.0
        %v451 = vrot.slane %v450, 4
        %v452 = vadd.f32 %v450, %v451
        %v453 = vrot.slane %v452, 2
        %v454 = vadd.f32 %v452, %v453
        %v455 = vrot.slane %v454, 1
        %v456 = vadd.f32 %v454, %v455
        %v457 = vsel %vm222, %v442, 0.0
        %v458 = vrot.slane %v457, 4
        %v459 = vadd.f32 %v457, %v458
        %v460 = vrot.slane %v459, 2
        %v461 = vadd.f32 %v459, %v460
        %v462 = vrot.slane %v461, 1
        %v463 = vadd.f32 %v461, %v462
        %v464 = vld [vmem:[%s3] sm:$0xff]
        %vm468 = vcmask 1041409
        %v469 = vsel %vm468, %v433, %v427
        %vm470 = vcmask 1042434
        %v471 = vsel %vm470, %v439, %v469
        %v472 = vsel %vm355, %v471, 0
        %474 = vmatprep.subr.mxu0 0.0
        %475 = vmatpush1.msra.mxu0 %v464
        %476 = vmatprep.subr.mxu0 0.0
        %477 = vmatpush1.msra.mxu0 0.0
        %478 = vmatprep.subr.mxu0 0.0
        %479 = vmatpush1.msra.mxu0 0.0
        %480 = vmatprep.subr.mxu0 0.0
        %481 = vmatpush1.msra.mxu0 0.0
        %482 = vmatprep.subr.mxu0 0.0
        %483 = vmatpush1.msra.mxu0 0.0
        %484 = vmatprep.subr.mxu0 0.0
        %485 = vmatpush1.msra.mxu0 0.0
        %486 = vmatprep.subr.mxu0 0.0
        %487 = vmatpush1.msra.mxu0 0.0
        %488 = vmatprep.subr.mxu0 0.0
        %489 = vmatpush1.msra.mxu0 0.0
        %490 = vmatprep.subr.mxu0 0.0
        %491 = vmatpush1.msra.mxu0 0.0
        %492 = vmatprep.subr.mxu0 0.0
        %493 = vmatpush1.msra.mxu0 0.0
        %494 = vmatprep.subr.mxu0 0.0
        %495 = vmatpush1.msra.mxu0 0.0
        %496 = vmatprep.subr.mxu0 0.0
        %497 = vmatpush1.msra.mxu0 0.0
        %498 = vmatprep.subr.mxu0 0.0
        %499 = vmatpush1.msra.mxu0 0.0
        %500 = vmatprep.subr.mxu0 0.0
        %501 = vmatpush1.msra.mxu0 0.0
        %502 = vmatprep.subr.mxu0 0.0
        %503 = vmatpush1.msra.mxu0 0.0
        %504 = vmatprep.subr.mxu0 0.0
        %505 = vmatpush1.msra.mxu0 0.0
        %506 = vmatprep.subr.mxu0 0.0
        %507 = vmatpush1.msra.mxu0 0.0
        %508 = vmatprep.subr.mxu0 0.0
        %509 = vmatpush1.msra.mxu0 0.0
        %510 = vmatprep.subr.mxu0 0.0
        %511 = vmatpush1.msra.mxu0 0.0
        %512 = vmatprep.subr.mxu0 0.0
        %513 = vmatpush1.msra.mxu0 0.0
        %514 = vmatprep.subr.mxu0 0.0
        %515 = vmatpush1.msra.mxu0 0.0
        %516 = vmatprep.subr.mxu0 0.0
        %517 = vmatpush1.msra.mxu0 0.0
        %518 = vmatprep.subr.mxu0 0.0
        %519 = vmatpush1.msra.mxu0 0.0
        %520 = vmatprep.subr.mxu0 0.0
        %521 = vmatpush1.msra.mxu0 0.0
        %522 = vmatprep.subr.mxu0 0.0
        %523 = vmatpush1.msra.mxu0 0.0
        %524 = vmatprep.subr.mxu0 0.0
        %525 = vmatpush1.msra.mxu0 0.0
        %526 = vmatprep.subr.mxu0 0.0
        %527 = vmatpush1.msra.mxu0 0.0
        %528 = vmatprep.subr.mxu0 0.0
        %529 = vmatpush1.msra.mxu0 0.0
        %530 = vmatprep.subr.mxu0 0.0
        %531 = vmatpush1.msra.mxu0 0.0
        %532 = vmatprep.subr.mxu0 0.0
        %533 = vmatpush1.msra.mxu0 0.0
        %534 = vmatprep.subr.mxu0 0.0
        %535 = vmatpush1.msra.mxu0 0.0
        %536 = vmatprep.subr.mxu0 0.0
        %537 = vmatpush1.msra.mxu0 0.0
        %538 = vmatprep.mubr.f32.mxu0 0.0
        %539 = vmatmul.mubr.f32.gmra.mrb[0].mxu0 %v472
        %v540 = vpop.f32.mrb[0].mxu0
        %v541 = vadd.f32 0.0, %v540
        %v542 = vpop.f32.mrb[0].mxu0
        %543 = vdwg.mxu0
        %v544 = vmul.f32 %v245, 0.125
        %v545 = vmul.f32 %v246, 0.125
        %v546 = vmul.f32 %v247, 0.125
        %v548 = vrot.slane %v541, 1
        %v549 = vrot.slane %v541, 2
        %v553 = vsub.f32 %v449, %v541
        %v554 = vsub.f32 %v456, %v548
        %v555 = vsub.f32 %v463, %v549
        %v556 = vmul.f32 %v544, %v553
        %v557 = vmul.f32 %v545, %v554
        %v558 = vmul.f32 %v546, %v555
        %v562 = vrot.slane %v557, 7
        %v563 = vsel %vm468, %v562, %v556
        %v564 = vrot.slane %v558, 6
        %v565 = vsel %vm470, %v564, %v563
        %vm567 = vcmask 124928
        %568 = vst.msk [vmem:[%s215] sm:$0x7] %vm567, %v565
        %p569 = scmp.lt.s32.totalorder %s18, 1
        %s570 = scalar_select %p569, %s18, 1
        %s571 = smul.addr %s570, 4
        %s572 = scalar_lea.vmem %s4, %s571
        // Predicated region
        $region41: #{tpu_custom_call.1} parent=35 // pred_check
          %p573 = pneg %p125
        $region42: #{tpu_custom_call.1} parent=35 // pred_check_branch
          %575 = sbr.rel (%p573) target = $region44
        $region43: #{tpu_custom_call.1} parent=35 // pred_region
          _
        $region44: #{tpu_custom_call.1} parent=35 // pred_fallthru
          _
      $region36: #{tpu_custom_call.1} parent=5 // pred_fallthru
        _
      %p576 = scmp.le.s32.totalorder 2, %s13
      // Predicated region
      $region45: #{tpu_custom_call.1} parent=5 // pred_check
        %p577 = pneg %p576
      $region46: #{tpu_custom_call.1} parent=5 // pred_check_branch
        %579 = sbr.rel (%p577) target = $region48
      $region47: #{tpu_custom_call.1} parent=5 // pred_region
        %s580 = ssub.s32 %s13, 2
        // Predicated region
        $region49: #{tpu_custom_call.1} parent=47 // pred_check
          %p581 = pneg %p131
        $region50: #{tpu_custom_call.1} parent=47 // pred_check_branch
          %583 = sbr.rel (%p581) target = $region52
        $region51: #{tpu_custom_call.1} parent=47 // pred_region
          %p584 = scmp.lt.s32.totalorder %s19, 1
          %s585 = scalar_select %p584, %s19, 1
          %s586 = smul.addr %s585, 4
          %s587 = scalar_lea.vmem %s4, %s586
        $region52: #{tpu_custom_call.1} parent=47 // pred_fallthru
          _
      $region48: #{tpu_custom_call.1} parent=5 // pred_fallthru
        _
    $region6: #{tpu_custom_call.1} parent=1 // loop_footer
      %s17 = sadd.s32 1, %s13
    $region7: #{tpu_custom_call.1} parent=1 // loop_footer_branch
      %12 = sbr.rel target = $region3
    $region8: #{tpu_custom_call.1} parent=1 // loop_exit
      _
    %588 = vsyncpa [#allocation3], 1
    %s589 = scalar_lea.sflag [#allocation3], 1
    %590 = vsyncpa %s589, 1

</llo_original>
